<compile_context>
chip_gen: v7x
topology: tpu7x:2x2x1
jax: 0.10.0
libtpu: 0.0.40
codegen_flags: <defaults>
</compile_context>

<pallas_src>
import functools

import jax
import jax.numpy as jnp
from jax.experimental import pallas as pl
from jax.experimental.pallas import tpu as pltpu

# ---- module hyper-parameters (small, consistent with the PyTorch module) ----
CROSS_ATTENTION_DIM = 256        # cross_attention_dim
CLIP_EMBEDDINGS_DIM = 256        # clip_embeddings_dim
CLIP_EXTRA_CONTEXT_TOKENS = 4    # clip_extra_context_tokens
LN_EPS = 1e-5                    # torch.nn.LayerNorm default eps


# ------------------------------ kernels --------------------------------------


def image_proj_token_kernel(x_ref, w_ref, b_ref, gamma_ref, beta_ref, o_ref):
    """Per-(token, batch-tile) block.

    x:(tile_b,Din) bf16  w:(Din,C) bf16  b/gamma/beta:(1,C) f32  o:(tile_b,C).
    One MXU matmul per block, LayerNorm over the whole (tile_b, C) block.
    """
    y = jnp.dot(x_ref[...], w_ref[...], preferred_element_type=jnp.float32)
    y = y + b_ref[...].astype(jnp.float32)                       # (tile_b, C) f32

    mean = jnp.mean(y, axis=-1, keepdims=True)
    centered = y - mean
    var = jnp.mean(centered * centered, axis=-1, keepdims=True)  # biased variance
    inv = jax.lax.rsqrt(var + LN_EPS)
    o_ref[...] = (centered * inv * gamma_ref[...].astype(jnp.float32)
                  + beta_ref[...].astype(jnp.float32)).astype(o_ref.dtype)


def image_proj_fused_kernel(x_ref, w_ref, b_ref, gamma_ref, beta_ref, o_ref,
                            *, num_tokens):
    """Single-step fused-width path (v5e/v6e, small B).

    x:(tile_b,Din) bf16  w:(Din,T*C) bf16  b:(1,T*C) f32  gamma/beta:(1,C) f32
    o:(tile_b,T*C).
    """
    y = jnp.dot(x_ref[...], w_ref[...], preferred_element_type=jnp.float32)
    y = y + b_ref[...].astype(jnp.float32)                       # (tile_b, T*C) f32

    gamma = gamma_ref[...].astype(jnp.float32)                   # hoisted casts
    beta = beta_ref[...].astype(jnp.float32)
    C = gamma.shape[-1]

    # LayerNorm per token on static lane slices (C % 128 == 0 -> full-tile,
    # unmasked stores). T is tiny, so a static unrolled loop is fine.
    for t in range(num_tokens):
        y_t = y[:, t * C:(t + 1) * C]                            # (tile_b, C)
        mean = jnp.mean(y_t, axis=-1, keepdims=True)
        centered = y_t - mean
        var = jnp.mean(centered * centered, axis=-1, keepdims=True)
        inv = jax.lax.rsqrt(var + LN_EPS)
        o_ref[:, t * C:(t + 1) * C] = (centered * inv * gamma + beta).astype(o_ref.dtype)


# ------------------------------ wrapper ---------------------------------------


def _is_v7x():
    """Best-effort generation probe (2 TensorCores/chip -> token split pays)."""
    try:
        kind = jax.devices()[0].device_kind.lower()
        return ("v7" in kind) or ("7x" in kind)
    except Exception:  # pragma: no cover - never block the kernel on a probe
        return False


def image_proj_model(image_embeds, w, b, gamma, beta,
                     *, tokens=CLIP_EXTRA_CONTEXT_TOKENS,
                     out_dtype=jnp.bfloat16, split_tokens=None):
    """image_embeds: (B, Din) -> (B, tokens, C).  w is pre-transposed (Din, tokens*C)."""
    B, d_in = image_embeds.shape
    d_in_w, TC = w.shape
    assert d_in_w == d_in and TC % tokens == 0
    C = TC // tokens
    assert C % 128 == 0, "cross_attention_dim must be lane-dense (multiple of 128)"
    assert gamma.shape == (1, C) and beta.shape == (1, C) and b.shape == (1, TC)

    # Batch tiling: 128 rows fully feed the MXU while keeping the per-step f32
    # slab small; weights stay VMEM-resident across batch tiles.
    tile_b = B if B <= 128 else 128
    nb = pl.cdiv(B, tile_b)

    if split_tokens is None:
        # v7x: split so both TensorCores get work even at B=2 and each weight
        # column slice is fetched once. Large B on any gen: split to shrink the
        # live f32 intermediate. Small B on v5e/v6e: keep the single-step path.
        split_tokens = _is_v7x() or nb > 1

    out_bytes = B * TC * jnp.dtype(out_dtype).itemsize
    cost = pl.CostEstimate(
        flops=2 * B * d_in * TC,
        transcendentals=B * tokens,   # one rsqrt per (row, token)
        bytes_accessed=(image_embeds.size * image_embeds.dtype.itemsize
                        + w.size * w.dtype.itemsize
                        + b.size * b.dtype.itemsize
                        + gamma.size * gamma.dtype.itemsize
                        + beta.size * beta.dtype.itemsize
                        + out_bytes),
    )

    if split_tokens:
        # Token is the OUTER grid axis: W/bias block indices only change when t
        # changes, so each (Din, C) weight slice is DMA'd exactly once total.
        grid = (tokens, nb)
        kernel = image_proj_token_kernel
        in_specs = [
            pl.BlockSpec((tile_b, d_in), lambda t, i: (i, 0)),   # x batch tile
            pl.BlockSpec((d_in, C), lambda t, i: (0, t)),        # W column slice
            pl.BlockSpec((1, C), lambda t, i: (0, t)),           # bias slice
            pl.BlockSpec((1, C), lambda t, i: (0, 0)),           # gamma: resident
            pl.BlockSpec((1, C), lambda t, i: (0, 0)),           # beta: resident
        ]
        out_specs = pl.BlockSpec((tile_b, C), lambda t, i: (i, t))
        dims = ("parallel", "parallel")
    else:
        grid = (nb,)
        kernel = functools.partial(image_proj_fused_kernel, num_tokens=tokens)
        in_specs = [
            pl.BlockSpec((tile_b, d_in), lambda i: (i, 0)),      # x batch tile
            pl.BlockSpec((d_in, TC), lambda i: (0, 0)),          # weight: resident
            pl.BlockSpec((1, TC), lambda i: (0, 0)),             # bias: resident
            pl.BlockSpec((1, C), lambda i: (0, 0)),              # gamma: resident
            pl.BlockSpec((1, C), lambda i: (0, 0)),              # beta: resident
        ]
        out_specs = pl.BlockSpec((tile_b, TC), lambda i: (i, 0))
        dims = ("parallel",)

    y = pl.pallas_call(
        kernel,
        out_shape=jax.ShapeDtypeStruct((B, TC), out_dtype),      # lane-dense output
        grid=grid,
        in_specs=in_specs,
        out_specs=out_specs,
        compiler_params=pltpu.CompilerParams(dimension_semantics=dims),
        cost_estimate=cost,
    )(image_embeds, w, b, gamma, beta)

    # Free reshape outside the kernel (bitcast in XLA), matching PyTorch layout.
    return y.reshape(B, tokens, C)


# ------------------------------ reference -------------------------------------


def _reference(image_embeds, w, b, gamma, beta, tokens):
    """Pure-JAX reference matching the PyTorch forward (f32 math)."""
    B = image_embeds.shape[0]
    C = gamma.shape[-1]
    y = image_embeds.astype(jnp.float32) @ w.astype(jnp.float32) + b[0].astype(jnp.float32)
    y = y.reshape(B, tokens, C)
    mean = jnp.mean(y, axis=-1, keepdims=True)
    var = jnp.mean((y - mean) ** 2, axis=-1, keepdims=True)
    return (y - mean) / jnp.sqrt(var + LN_EPS) * gamma[0].astype(jnp.float32) \
        + beta[0].astype(jnp.float32)


if __name__ == "__main__":
    key = jax.random.PRNGKey(0)
    k_x, k_w, k_b, k_g, k_be = jax.random.split(key, 5)

    B = 2
    T = CLIP_EXTRA_CONTEXT_TOKENS
    C = CROSS_ATTENTION_DIM
    D_IN = CLIP_EMBEDDINGS_DIM

    # bf16 activations + pre-transposed bf16 weight (Din, T*C); small params in f32.
    image_embeds = jax.random.normal(k_x, (B, D_IN), dtype=jnp.float32).astype(jnp.bfloat16)
    w = (jax.random.normal(k_w, (D_IN, T * C), dtype=jnp.float32) * 0.02).astype(jnp.bfloat16)
    b = jax.random.normal(k_b, (1, T * C), dtype=jnp.float32) * 0.02
    gamma = 1.0 + jax.random.normal(k_g, (1, C), dtype=jnp.float32) * 0.1
    beta = jax.random.normal(k_be, (1, C), dtype=jnp.float32) * 0.1

    ref = _reference(image_embeds, w, b, gamma, beta, T)

    # 1) Single-step fused-width path (v5e/v6e small-B layout), f32 output.
    out_fused = image_proj_model(image_embeds, w, b, gamma, beta,
                                 out_dtype=jnp.float32, split_tokens=False)
    out_fused = jax.block_until_ready(out_fused)
    assert out_fused.shape == (B, T, C)
    assert jnp.allclose(out_fused, ref, atol=2e-3, rtol=2e-3), "fused path mismatch"

    # 2) Token-split path (v7x layout / large-B layout), f32 output.
    out_split = image_proj_model(image_embeds, w, b, gamma, beta,
                                 out_dtype=jnp.float32, split_tokens=True)
    out_split = jax.block_until_ready(out_split)
    assert out_split.shape == (B, T, C)
    assert jnp.allclose(out_split, ref, atol=2e-3, rtol=2e-3), "token-split path mismatch"

    # 3) Default configuration: auto path selection, bf16 output (writeback-bound
    #    regime at large B); looser tolerance for the bf16 store.
    out_default = image_proj_model(image_embeds, w, b, gamma, beta)
    out_default = jax.block_until_ready(out_default)
    assert out_default.shape == (B, T, C)
    assert out_default.dtype == jnp.bfloat16
    assert jnp.allclose(out_default.astype(jnp.float32), ref, atol=3e-2, rtol=3e-2), \
        "default (bf16) path mismatch"

    print("KERNEL_OK")
</pallas_src>

<mosaic_0001>
module attributes {stable_mosaic.version = 11 : i64} {
  func.func @image_proj_fused_kernel(%arg0: i32, %arg1: memref<2x256xbf16, #tpu.memory_space<vmem>>, %arg2: memref<256x1024xbf16, #tpu.memory_space<vmem>>, %arg3: memref<1x1024xf32, #tpu.memory_space<vmem>>, %arg4: memref<1x256xf32, #tpu.memory_space<vmem>>, %arg5: memref<1x256xf32, #tpu.memory_space<vmem>>, %arg6: memref<2x1024xf32, #tpu.memory_space<vmem>>) attributes {dimension_semantics = [#tpu.dimension_semantics<parallel>], iteration_bounds = array<i64: 1>, scalar_prefetch = 0 : i64, scratch_operands = 0 : i64, tpu.core_type = #tpu.core_type<tc>, window_params = [{transform_indices = @transform_0, window_bounds = array<i64: 2, 256>}, {pipeline_mode = #tpu.pipeline_mode<synchronous>, transform_indices = @transform_1, window_bounds = array<i64: 256, 1024>}, {pipeline_mode = #tpu.pipeline_mode<synchronous>, transform_indices = @transform_2, window_bounds = array<i64: 1, 1024>}, {pipeline_mode = #tpu.pipeline_mode<synchronous>, transform_indices = @transform_3, window_bounds = array<i64: 1, 256>}, {pipeline_mode = #tpu.pipeline_mode<synchronous>, transform_indices = @transform_4, window_bounds = array<i64: 1, 256>}, {transform_indices = @transform_5, window_bounds = array<i64: 2, 1024>}]} {
    %c0 = arith.constant 0 : index
    %c0_0 = arith.constant 0 : index
    %0 = vector.load %arg1[%c0, %c0_0] : memref<2x256xbf16, #tpu.memory_space<vmem>>, vector<2x256xbf16>
    %c0_1 = arith.constant 0 : index
    %c0_2 = arith.constant 0 : index
    %1 = vector.load %arg2[%c0_1, %c0_2] : memref<256x1024xbf16, #tpu.memory_space<vmem>>, vector<256x1024xbf16>
    %cst = arith.constant dense<0.000000e+00> : vector<2x1024xf32>
    %2 = tpu.matmul %0, %1, %cst {dimension_numbers = #tpu.dot_dimension_numbers<[1], [0], [0], [1], [0, 0, 1, 1], [], []>} : vector<2x256xbf16>, vector<256x1024xbf16>, vector<2x1024xf32> -> vector<2x1024xf32>
    %c0_3 = arith.constant 0 : index
    %c0_4 = arith.constant 0 : index
    %3 = vector.load %arg3[%c0_3, %c0_4] : memref<1x1024xf32, #tpu.memory_space<vmem>>, vector<1x1024xf32>
    %4 = vector.broadcast %3 : vector<1x1024xf32> to vector<2x1024xf32>
    %5 = arith.addf %2, %4 : vector<2x1024xf32>
    %c0_5 = arith.constant 0 : index
    %c0_6 = arith.constant 0 : index
    %6 = vector.load %arg4[%c0_5, %c0_6] : memref<1x256xf32, #tpu.memory_space<vmem>>, vector<1x256xf32>
    %c0_7 = arith.constant 0 : index
    %c0_8 = arith.constant 0 : index
    %7 = vector.load %arg5[%c0_7, %c0_8] : memref<1x256xf32, #tpu.memory_space<vmem>>, vector<1x256xf32>
    %8 = vector.extract_strided_slice %5 {offsets = [0, 0], sizes = [2, 256], strides = [1, 1]} : vector<2x1024xf32> to vector<2x256xf32>
    %cst_9 = arith.constant dense<0.000000e+00> : vector<2xf32>
    %9 = vector.multi_reduction <add>, %8, %cst_9 [1] : vector<2x256xf32> to vector<2xf32>
    %10 = vector.shape_cast %9 : vector<2xf32> to vector<2x1xf32>
    %cst_10 = arith.constant 2.560000e+02 : f32
    %11 = vector.broadcast %cst_10 : f32 to vector<2x1xf32>
    %12 = arith.divf %10, %11 : vector<2x1xf32>
    %13 = vector.broadcast %12 : vector<2x1xf32> to vector<2x256xf32>
    %14 = arith.subf %8, %13 : vector<2x256xf32>
    %15 = arith.mulf %14, %14 : vector<2x256xf32>
    %cst_11 = arith.constant dense<0.000000e+00> : vector<2xf32>
    %16 = vector.multi_reduction <add>, %15, %cst_11 [1] : vector<2x256xf32> to vector<2xf32>
    %17 = vector.shape_cast %16 : vector<2xf32> to vector<2x1xf32>
    %cst_12 = arith.constant 2.560000e+02 : f32
    %18 = vector.broadcast %cst_12 : f32 to vector<2x1xf32>
    %19 = arith.divf %17, %18 : vector<2x1xf32>
    %cst_13 = arith.constant 9.99999974E-6 : f32
    %20 = vector.broadcast %cst_13 : f32 to vector<2x1xf32>
    %21 = arith.addf %19, %20 : vector<2x1xf32>
    %22 = math.rsqrt %21 : vector<2x1xf32>
    %23 = vector.broadcast %22 : vector<2x1xf32> to vector<2x256xf32>
    %24 = arith.mulf %14, %23 : vector<2x256xf32>
    %25 = vector.broadcast %6 : vector<1x256xf32> to vector<2x256xf32>
    %26 = arith.mulf %24, %25 : vector<2x256xf32>
    %27 = vector.broadcast %7 : vector<1x256xf32> to vector<2x256xf32>
    %28 = arith.addf %26, %27 : vector<2x256xf32>
    %c0_14 = arith.constant 0 : index
    %c0_15 = arith.constant 0 : index
    %29 = vector.load %arg6[%c0_14, %c0_15] : memref<2x1024xf32, #tpu.memory_space<vmem>>, vector<2x256xf32>
    tpu.vector_store %arg6[%c0_14, %c0_15], %28 {strides = array<i32>} : memref<2x1024xf32, #tpu.memory_space<vmem>>, vector<2x256xf32>,
    %30 = vector.extract_strided_slice %5 {offsets = [0, 256], sizes = [2, 256], strides = [1, 1]} : vector<2x1024xf32> to vector<2x256xf32>
    %cst_16 = arith.constant dense<0.000000e+00> : vector<2xf32>
    %31 = vector.multi_reduction <add>, %30, %cst_16 [1] : vector<2x256xf32> to vector<2xf32>
    %32 = vector.shape_cast %31 : vector<2xf32> to vector<2x1xf32>
    %cst_17 = arith.constant 2.560000e+02 : f32
    %33 = vector.broadcast %cst_17 : f32 to vector<2x1xf32>
    %34 = arith.divf %32, %33 : vector<2x1xf32>
    %35 = vector.broadcast %34 : vector<2x1xf32> to vector<2x256xf32>
    %36 = arith.subf %30, %35 : vector<2x256xf32>
    %37 = arith.mulf %36, %36 : vector<2x256xf32>
    %cst_18 = arith.constant dense<0.000000e+00> : vector<2xf32>
    %38 = vector.multi_reduction <add>, %37, %cst_18 [1] : vector<2x256xf32> to vector<2xf32>
    %39 = vector.shape_cast %38 : vector<2xf32> to vector<2x1xf32>
    %cst_19 = arith.constant 2.560000e+02 : f32
    %40 = vector.broadcast %cst_19 : f32 to vector<2x1xf32>
    %41 = arith.divf %39, %40 : vector<2x1xf32>
    %cst_20 = arith.constant 9.99999974E-6 : f32
    %42 = vector.broadcast %cst_20 : f32 to vector<2x1xf32>
    %43 = arith.addf %41, %42 : vector<2x1xf32>
    %44 = math.rsqrt %43 : vector<2x1xf32>
    %45 = vector.broadcast %44 : vector<2x1xf32> to vector<2x256xf32>
    %46 = arith.mulf %36, %45 : vector<2x256xf32>
    %47 = vector.broadcast %6 : vector<1x256xf32> to vector<2x256xf32>
    %48 = arith.mulf %46, %47 : vector<2x256xf32>
    %49 = vector.broadcast %7 : vector<1x256xf32> to vector<2x256xf32>
    %50 = arith.addf %48, %49 : vector<2x256xf32>
    %c0_21 = arith.constant 0 : index
    %c256 = arith.constant 256 : index
    %51 = vector.load %arg6[%c0_21, %c256] : memref<2x1024xf32, #tpu.memory_space<vmem>>, vector<2x256xf32>
    tpu.vector_store %arg6[%c0_21, %c256], %50 {strides = array<i32>} : memref<2x1024xf32, #tpu.memory_space<vmem>>, vector<2x256xf32>,
    %52 = vector.extract_strided_slice %5 {offsets = [0, 512], sizes = [2, 256], strides = [1, 1]} : vector<2x1024xf32> to vector<2x256xf32>
    %cst_22 = arith.constant dense<0.000000e+00> : vector<2xf32>
    %53 = vector.multi_reduction <add>, %52, %cst_22 [1] : vector<2x256xf32> to vector<2xf32>
    %54 = vector.shape_cast %53 : vector<2xf32> to vector<2x1xf32>
    %cst_23 = arith.constant 2.560000e+02 : f32
    %55 = vector.broadcast %cst_23 : f32 to vector<2x1xf32>
    %56 = arith.divf %54, %55 : vector<2x1xf32>
    %57 = vector.broadcast %56 : vector<2x1xf32> to vector<2x256xf32>
    %58 = arith.subf %52, %57 : vector<2x256xf32>
    %59 = arith.mulf %58, %58 : vector<2x256xf32>
    %cst_24 = arith.constant dense<0.000000e+00> : vector<2xf32>
    %60 = vector.multi_reduction <add>, %59, %cst_24 [1] : vector<2x256xf32> to vector<2xf32>
    %61 = vector.shape_cast %60 : vector<2xf32> to vector<2x1xf32>
    %cst_25 = arith.constant 2.560000e+02 : f32
    %62 = vector.broadcast %cst_25 : f32 to vector<2x1xf32>
    %63 = arith.divf %61, %62 : vector<2x1xf32>
    %cst_26 = arith.constant 9.99999974E-6 : f32
    %64 = vector.broadcast %cst_26 : f32 to vector<2x1xf32>
    %65 = arith.addf %63, %64 : vector<2x1xf32>
    %66 = math.rsqrt %65 : vector<2x1xf32>
    %67 = vector.broadcast %66 : vector<2x1xf32> to vector<2x256xf32>
    %68 = arith.mulf %58, %67 : vector<2x256xf32>
    %69 = vector.broadcast %6 : vector<1x256xf32> to vector<2x256xf32>
    %70 = arith.mulf %68, %69 : vector<2x256xf32>
    %71 = vector.broadcast %7 : vector<1x256xf32> to vector<2x256xf32>
    %72 = arith.addf %70, %71 : vector<2x256xf32>
    %c0_27 = arith.constant 0 : index
    %c512 = arith.constant 512 : index
    %73 = vector.load %arg6[%c0_27, %c512] : memref<2x1024xf32, #tpu.memory_space<vmem>>, vector<2x256xf32>
    tpu.vector_store %arg6[%c0_27, %c512], %72 {strides = array<i32>} : memref<2x1024xf32, #tpu.memory_space<vmem>>, vector<2x256xf32>,
    %74 = vector.extract_strided_slice %5 {offsets = [0, 768], sizes = [2, 256], strides = [1, 1]} : vector<2x1024xf32> to vector<2x256xf32>
    %cst_28 = arith.constant dense<0.000000e+00> : vector<2xf32>
    %75 = vector.multi_reduction <add>, %74, %cst_28 [1] : vector<2x256xf32> to vector<2xf32>
    %76 = vector.shape_cast %75 : vector<2xf32> to vector<2x1xf32>
    %cst_29 = arith.constant 2.560000e+02 : f32
    %77 = vector.broadcast %cst_29 : f32 to vector<2x1xf32>
    %78 = arith.divf %76, %77 : vector<2x1xf32>
    %79 = vector.broadcast %78 : vector<2x1xf32> to vector<2x256xf32>
    %80 = arith.subf %74, %79 : vector<2x256xf32>
    %81 = arith.mulf %80, %80 : vector<2x256xf32>
    %cst_30 = arith.constant dense<0.000000e+00> : vector<2xf32>
    %82 = vector.multi_reduction <add>, %81, %cst_30 [1] : vector<2x256xf32> to vector<2xf32>
    %83 = vector.shape_cast %82 : vector<2xf32> to vector<2x1xf32>
    %cst_31 = arith.constant 2.560000e+02 : f32
    %84 = vector.broadcast %cst_31 : f32 to vector<2x1xf32>
    %85 = arith.divf %83, %84 : vector<2x1xf32>
    %cst_32 = arith.constant 9.99999974E-6 : f32
    %86 = vector.broadcast %cst_32 : f32 to vector<2x1xf32>
    %87 = arith.addf %85, %86 : vector<2x1xf32>
    %88 = math.rsqrt %87 : vector<2x1xf32>
    %89 = vector.broadcast %88 : vector<2x1xf32> to vector<2x256xf32>
    %90 = arith.mulf %80, %89 : vector<2x256xf32>
    %91 = vector.broadcast %6 : vector<1x256xf32> to vector<2x256xf32>
    %92 = arith.mulf %90, %91 : vector<2x256xf32>
    %93 = vector.broadcast %7 : vector<1x256xf32> to vector<2x256xf32>
    %94 = arith.addf %92, %93 : vector<2x256xf32>
    %c0_33 = arith.constant 0 : index
    %c768 = arith.constant 768 : index
    %95 = vector.load %arg6[%c0_33, %c768] : memref<2x1024xf32, #tpu.memory_space<vmem>>, vector<2x256xf32>
    tpu.vector_store %arg6[%c0_33, %c768], %94 {strides = array<i32>} : memref<2x1024xf32, #tpu.memory_space<vmem>>, vector<2x256xf32>,
    return
  }
  func.func @transform_0(%arg0: i32) -> (i32, i32) {
    %c0_i32 = arith.constant 0 : i32
    %c0_i32_0 = arith.constant 0 : i32
    return %arg0, %c0_i32 : i32, i32
  }
  func.func @transform_1(%arg0: i32) -> (i32, i32) {
    %c0_i32 = arith.constant 0 : i32
    %c0_i32_0 = arith.constant 0 : i32
    %c0_i32_1 = arith.constant 0 : i32
    return %c0_i32, %c0_i32_0 : i32, i32
  }
  func.func @transform_2(%arg0: i32) -> (i32, i32) {
    %c0_i32 = arith.constant 0 : i32
    %c0_i32_0 = arith.constant 0 : i32
    %c0_i32_1 = arith.constant 0 : i32
    return %c0_i32, %c0_i32_0 : i32, i32
  }
  func.func @transform_3(%arg0: i32) -> (i32, i32) {
    %c0_i32 = arith.constant 0 : i32
    %c0_i32_0 = arith.constant 0 : i32
    %c0_i32_1 = arith.constant 0 : i32
    return %c0_i32, %c0_i32_0 : i32, i32
  }
  func.func @transform_4(%arg0: i32) -> (i32, i32) {
    %c0_i32 = arith.constant 0 : i32
    %c0_i32_0 = arith.constant 0 : i32
    %c0_i32_1 = arith.constant 0 : i32
    return %c0_i32, %c0_i32_0 : i32, i32
  }
  func.func @transform_5(%arg0: i32) -> (i32, i32) {
    %c0_i32 = arith.constant 0 : i32
    %c0_i32_0 = arith.constant 0 : i32
    return %arg0, %c0_i32 : i32, i32
  }
}

</mosaic_0001>

<llo_original>
// kernel: tpu_custom_call.1
$region0: #{tpu_custom_call.1}
  #allocation0 [shape = 'u32[]', space=smem, size = 0x4, offset = 0x4, fixed_abs, tag = 'smem constant byte address 0x4 - core index']
  #allocation1 [shape = 'u32[144,128]{1,0:T(1,128)}', space=vmem, size = 0x12000, scoped, tag = 'internal scratch']
  %s0 = inlined_call_operand.hbm [shape: bf16[2,256], index: 0, kind: input, shape index: {}]
  %s1 = inlined_call_operand.hbm [shape: bf16[256,1024], index: 1, kind: input, shape index: {}]
  %s2 = inlined_call_operand.hbm [shape: f32[1,1024], index: 2, kind: input, shape index: {}]
  %s3 = inlined_call_operand.vmem [shape: f32[1,256], index: 3, kind: input, shape index: {}]
  %s4 = inlined_call_operand.vmem [shape: f32[1,256], index: 4, kind: input, shape index: {}]
  %s5 = inlined_call_operand.hbm [shape: f32[2,1024], index: 5, kind: output, shape index: {}]
  %s6 = sld [smem:[#allocation0]]
  $region42: #{tpu_custom_call.1} parent=0
    _
  %s8 = ssub.s32 1, %s6
  %s9 = scalar_select 0, %s8, %s6
  $region1: #{tpu_custom_call.1} parent=0
    #allocation2 [shape = 'u8[1024]{0}', space=vmem, size = 0x400, scoped, tag = 'input window, operand 0, single buffered']
    #allocation3 [shape = 's32[1]{0}', space=sflag, size = 0x4, scoped, tag = 'scoped memory for tpu_custom_call.1']
    #allocation4 [shape = 's32[1]{0}', space=sflag, size = 0x4, scoped, tag = 'scoped memory for tpu_custom_call.1']
    #allocation5 [shape = 'u8[524288]{0}', space=vmem, size = 0x80000, scoped, tag = 'input window, operand 1, single buffered']
    #allocation6 [shape = 's32[1]{0}', space=sflag, size = 0x4, scoped, tag = 'scoped memory for tpu_custom_call.1']
    #allocation7 [shape = 'u8[4096]{0}', space=vmem, size = 0x1000, scoped, tag = 'input window, operand 2, single buffered']
    #allocation8 [shape = 'u8[8192]{0}', space=vmem, size = 0x2000, scoped, tag = 'output window, operand 0, single buffered']
    %10 = vsyncpa [#allocation3], 0
    %11 = vsyncpa [#allocation6], 0
    %12 = vsyncpa [#allocation4], 0
    // Predicated region
    $region2: #{tpu_custom_call.1} parent=1 // pred_check
      _
    $region3: #{tpu_custom_call.1} parent=1 // pred_check_branch
      %14 = sbr.rel (0) target = $region5
    $region4: #{tpu_custom_call.1} parent=1 // pred_region
      %s16 = ssub.s32 32, 32
      %17 = vsyncadd [#allocation3], %s16
      %s19 = sshll.u32 [#allocation2], 4
      %s20 = int_to_ptr.vmem [resolvable:$true] %s19
      %22 = dma.hbm_to_vmem [thread:$0]  %s0, 32, %s20, [#allocation3]
    $region5: #{tpu_custom_call.1} parent=1 // pred_fallthru
      _
    // Predicated region
    $region6: #{tpu_custom_call.1} parent=1 // pred_check
      _
    $region7: #{tpu_custom_call.1} parent=1 // pred_check_branch
      %24 = sbr.rel (0) target = $region9
    $region8: #{tpu_custom_call.1} parent=1 // pred_region
      %s26 = ssub.s32 16384, 16384
      %27 = vsyncadd [#allocation6], %s26
      %s28 = sshll.u32 [#allocation5], 4
      %s29 = int_to_ptr.vmem [resolvable:$true] %s28
      %34 = dma.hbm_to_vmem [thread:$0]  %s1, 16384, %s29, [#allocation6], 512, 512, 32
    $region9: #{tpu_custom_call.1} parent=1 // pred_fallthru
      _
    // Predicated region
    $region10: #{tpu_custom_call.1} parent=1 // pred_check
      _
    $region11: #{tpu_custom_call.1} parent=1 // pred_check_branch
      %36 = sbr.rel (0) target = $region13
    $region12: #{tpu_custom_call.1} parent=1 // pred_region
      %s38 = ssub.s32 128, 128
      %39 = vsyncadd [#allocation6], %s38
      %s41 = sshll.u32 [#allocation7], 4
      %s42 = int_to_ptr.vmem [resolvable:$true] %s41
      %44 = dma.hbm_to_vmem [thread:$0]  %s2, 128, %s42, [#allocation6]
    $region13: #{tpu_custom_call.1} parent=1 // pred_fallthru
      _
    // Predicated region
    $region14: #{tpu_custom_call.1} parent=1 // pred_check
      _
    $region15: #{tpu_custom_call.1} parent=1 // pred_check_branch
      %46 = sbr.rel (0) target = $region17
    $region16: #{tpu_custom_call.1} parent=1 // pred_region
      _
    $region17: #{tpu_custom_call.1} parent=1 // pred_fallthru
      _
    // Predicated region
    $region18: #{tpu_custom_call.1} parent=1 // pred_check
      _
    $region19: #{tpu_custom_call.1} parent=1 // pred_check_branch
      %48 = sbr.rel (0) target = $region21
    $region20: #{tpu_custom_call.1} parent=1 // pred_region
      _
    $region21: #{tpu_custom_call.1} parent=1 // pred_fallthru
      _
    // Predicated region
    $region22: #{tpu_custom_call.1} parent=1 // pred_check
      _
    $region23: #{tpu_custom_call.1} parent=1 // pred_check_branch
      %50 = sbr.rel (0) target = $region25
    $region24: #{tpu_custom_call.1} parent=1 // pred_region
      %51 = dma.done [#allocation3], 32
    $region25: #{tpu_custom_call.1} parent=1 // pred_fallthru
      _
    // Predicated region
    $region26: #{tpu_custom_call.1} parent=1 // pred_check
      _
    $region27: #{tpu_custom_call.1} parent=1 // pred_check_branch
      %53 = sbr.rel (0) target = $region29
    $region28: #{tpu_custom_call.1} parent=1 // pred_region
      %54 = dma.done [#allocation6], 16384
    $region29: #{tpu_custom_call.1} parent=1 // pred_fallthru
      _
    // Predicated region
    $region30: #{tpu_custom_call.1} parent=1 // pred_check
      _
    $region31: #{tpu_custom_call.1} parent=1 // pred_check_branch
      %56 = sbr.rel (0) target = $region33
    $region32: #{tpu_custom_call.1} parent=1 // pred_region
      %57 = dma.done [#allocation6], 128
    $region33: #{tpu_custom_call.1} parent=1 // pred_fallthru
      _
    %v58 = vld [vmem:[#allocation2] sm:$0x3]
    %v59 = vld [vmem:[#allocation5] sm:$0xff]
    %v60 = vld [vmem:[#allocation5 + $0x8] sm:$0xff]
    %v61 = vld [vmem:[#allocation5 + $0x10] sm:$0xff]
    %v62 = vld [vmem:[#allocation5 + $0x18] sm:$0xff]
    %v63 = vld [vmem:[#allocation5 + $0x20] sm:$0xff]
    %v64 = vld [vmem:[#allocation5 + $0x28] sm:$0xff]
    %v65 = vld [vmem:[#allocation5 + $0x30] sm:$0xff]
    %v66 = vld [vmem:[#allocation5 + $0x38] sm:$0xff]
    %v67 = vld [vmem:[#allocation5 + $0x40] sm:$0xff]
    %v68 = vld [vmem:[#allocation5 + $0x48] sm:$0xff]
    %v69 = vld [vmem:[#allocation5 + $0x50] sm:$0xff]
    %v70 = vld [vmem:[#allocation5 + $0x58] sm:$0xff]
    %v71 = vld [vmem:[#allocation5 + $0x60] sm:$0xff]
    %v72 = vld [vmem:[#allocation5 + $0x68] sm:$0xff]
    %v73 = vld [vmem:[#allocation5 + $0x70] sm:$0xff]
    %v74 = vld [vmem:[#allocation5 + $0x78] sm:$0xff]
    %v75 = vld [vmem:[#allocation5 + $0x80] sm:$0xff]
    %v76 = vld [vmem:[#allocation5 + $0x88] sm:$0xff]
    %v77 = vld [vmem:[#allocation5 + $0x90] sm:$0xff]
    %v78 = vld [vmem:[#allocation5 + $0x98] sm:$0xff]
    %v79 = vld [vmem:[#allocation5 + $0xa0] sm:$0xff]
    %v80 = vld [vmem:[#allocation5 + $0xa8] sm:$0xff]
    %v81 = vld [vmem:[#allocation5 + $0xb0] sm:$0xff]
    %v82 = vld [vmem:[#allocation5 + $0xb8] sm:$0xff]
    %v83 = vld [vmem:[#allocation5 + $0xc0] sm:$0xff]
    %v84 = vld [vmem:[#allocation5 + $0xc8] sm:$0xff]
    %v85 = vld [vmem:[#allocation5 + $0xd0] sm:$0xff]
    %v86 = vld [vmem:[#allocation5 + $0xd8] sm:$0xff]
    %v87 = vld [vmem:[#allocation5 + $0xe0] sm:$0xff]
    %v88 = vld [vmem:[#allocation5 + $0xe8] sm:$0xff]
    %v89 = vld [vmem:[#allocation5 + $0xf0] sm:$0xff]
    %v90 = vld [vmem:[#allocation5 + $0xf8] sm:$0xff]
    %v91 = vld [vmem:[#allocation5 + $0x100] sm:$0xff]
    %v92 = vld [vmem:[#allocation5 + $0x108] sm:$0xff]
    %v93 = vld [vmem:[#allocation5 + $0x110] sm:$0xff]
    %v94 = vld [vmem:[#allocation5 + $0x118] sm:$0xff]
    %v95 = vld [vmem:[#allocation5 + $0x120] sm:$0xff]
    %v96 = vld [vmem:[#allocation5 + $0x128] sm:$0xff]
    %v97 = vld [vmem:[#allocation5 + $0x130] sm:$0xff]
    %v98 = vld [vmem:[#allocation5 + $0x138] sm:$0xff]
    %v99 = vld [vmem:[#allocation5 + $0x140] sm:$0xff]
    %v100 = vld [vmem:[#allocation5 + $0x148] sm:$0xff]
    %v101 = vld [vmem:[#allocation5 + $0x150] sm:$0xff]
    %v102 = vld [vmem:[#allocation5 + $0x158] sm:$0xff]
    %v103 = vld [vmem:[#allocation5 + $0x160] sm:$0xff]
    %v104 = vld [vmem:[#allocation5 + $0x168] sm:$0xff]
    %v105 = vld [vmem:[#allocation5 + $0x170] sm:$0xff]
    %v106 = vld [vmem:[#allocation5 + $0x178] sm:$0xff]
    %v107 = vld [vmem:[#allocation5 + $0x180] sm:$0xff]
    %v108 = vld [vmem:[#allocation5 + $0x188] sm:$0xff]
    %v109 = vld [vmem:[#allocation5 + $0x190] sm:$0xff]
    %v110 = vld [vmem:[#allocation5 + $0x198] sm:$0xff]
    %v111 = vld [vmem:[#allocation5 + $0x1a0] sm:$0xff]
    %v112 = vld [vmem:[#allocation5 + $0x1a8] sm:$0xff]
    %v113 = vld [vmem:[#allocation5 + $0x1b0] sm:$0xff]
    %v114 = vld [vmem:[#allocation5 + $0x1b8] sm:$0xff]
    %v115 = vld [vmem:[#allocation5 + $0x1c0] sm:$0xff]
    %v116 = vld [vmem:[#allocation5 + $0x1c8] sm:$0xff]
    %v117 = vld [vmem:[#allocation5 + $0x1d0] sm:$0xff]
    %v118 = vld [vmem:[#allocation5 + $0x1d8] sm:$0xff]
    %v119 = vld [vmem:[#allocation5 + $0x1e0] sm:$0xff]
    %v120 = vld [vmem:[#allocation5 + $0x1e8] sm:$0xff]
    %v121 = vld [vmem:[#allocation5 + $0x1f0] sm:$0xff]
    %v122 = vld [vmem:[#allocation5 + $0x1f8] sm:$0xff]
    %v123 = vld [vmem:[#allocation5 + $0x200] sm:$0xff]
    %v124 = vld [vmem:[#allocation5 + $0x208] sm:$0xff]
    %v125 = vld [vmem:[#allocation5 + $0x210] sm:$0xff]
    %v126 = vld [vmem:[#allocation5 + $0x218] sm:$0xff]
    %v127 = vld [vmem:[#allocation5 + $0x220] sm:$0xff]
    %v128 = vld [vmem:[#allocation5 + $0x228] sm:$0xff]
    %v129 = vld [vmem:[#allocation5 + $0x230] sm:$0xff]
    %v130 = vld [vmem:[#allocation5 + $0x238] sm:$0xff]
    %v131 = vld [vmem:[#allocation5 + $0x240] sm:$0xff]
    %v132 = vld [vmem:[#allocation5 + $0x248] sm:$0xff]
    %v133 = vld [vmem:[#allocation5 + $0x250] sm:$0xff]
    %v134 = vld [vmem:[#allocation5 + $0x258] sm:$0xff]
    %v135 = vld [vmem:[#allocation5 + $0x260] sm:$0xff]
    %v136 = vld [vmem:[#allocation5 + $0x268] sm:$0xff]
    %v137 = vld [vmem:[#allocation5 + $0x270] sm:$0xff]
    %v138 = vld [vmem:[#allocation5 + $0x278] sm:$0xff]
    %v139 = vld [vmem:[#allocation5 + $0x280] sm:$0xff]
    %v140 = vld [vmem:[#allocation5 + $0x288] sm:$0xff]
    %v141 = vld [vmem:[#allocation5 + $0x290] sm:$0xff]
    %v142 = vld [vmem:[#allocation5 + $0x298] sm:$0xff]
    %v143 = vld [vmem:[#allocation5 + $0x2a0] sm:$0xff]
    %v144 = vld [vmem:[#allocation5 + $0x2a8] sm:$0xff]
    %v145 = vld [vmem:[#allocation5 + $0x2b0] sm:$0xff]
    %v146 = vld [vmem:[#allocation5 + $0x2b8] sm:$0xff]
    %v147 = vld [vmem:[#allocation5 + $0x2c0] sm:$0xff]
    %v148 = vld [vmem:[#allocation5 + $0x2c8] sm:$0xff]
    %v149 = vld [vmem:[#allocation5 + $0x2d0] sm:$0xff]
    %v150 = vld [vmem:[#allocation5 + $0x2d8] sm:$0xff]
    %v151 = vld [vmem:[#allocation5 + $0x2e0] sm:$0xff]
    %v152 = vld [vmem:[#allocation5 + $0x2e8] sm:$0xff]
    %v153 = vld [vmem:[#allocation5 + $0x2f0] sm:$0xff]
    %v154 = vld [vmem:[#allocation5 + $0x2f8] sm:$0xff]
    %v155 = vld [vmem:[#allocation5 + $0x300] sm:$0xff]
    %v156 = vld [vmem:[#allocation5 + $0x308] sm:$0xff]
    %v157 = vld [vmem:[#allocation5 + $0x310] sm:$0xff]
    %v158 = vld [vmem:[#allocation5 + $0x318] sm:$0xff]
    %v159 = vld [vmem:[#allocation5 + $0x320] sm:$0xff]
    %v160 = vld [vmem:[#allocation5 + $0x328] sm:$0xff]
    %v161 = vld [vmem:[#allocation5 + $0x330] sm:$0xff]
    %v162 = vld [vmem:[#allocation5 + $0x338] sm:$0xff]
    %v163 = vld [vmem:[#allocation5 + $0x340] sm:$0xff]
    %v164 = vld [vmem:[#allocation5 + $0x348] sm:$0xff]
    %v165 = vld [vmem:[#allocation5 + $0x350] sm:$0xff]
    %v166 = vld [vmem:[#allocation5 + $0x358] sm:$0xff]
    %v167 = vld [vmem:[#allocation5 + $0x360] sm:$0xff]
    %v168 = vld [vmem:[#allocation5 + $0x368] sm:$0xff]
    %v169 = vld [vmem:[#allocation5 + $0x370] sm:$0xff]
    %v170 = vld [vmem:[#allocation5 + $0x378] sm:$0xff]
    %v171 = vld [vmem:[#allocation5 + $0x380] sm:$0xff]
    %v172 = vld [vmem:[#allocation5 + $0x388] sm:$0xff]
    %v173 = vld [vmem:[#allocation5 + $0x390] sm:$0xff]
    %v174 = vld [vmem:[#allocation5 + $0x398] sm:$0xff]
    %v175 = vld [vmem:[#allocation5 + $0x3a0] sm:$0xff]
    %v176 = vld [vmem:[#allocation5 + $0x3a8] sm:$0xff]
    %v177 = vld [vmem:[#allocation5 + $0x3b0] sm:$0xff]
    %v178 = vld [vmem:[#allocation5 + $0x3b8] sm:$0xff]
    %v179 = vld [vmem:[#allocation5 + $0x3c0] sm:$0xff]
    %v180 = vld [vmem:[#allocation5 + $0x3c8] sm:$0xff]
    %v181 = vld [vmem:[#allocation5 + $0x3d0] sm:$0xff]
    %v182 = vld [vmem:[#allocation5 + $0x3d8] sm:$0xff]
    %v183 = vld [vmem:[#allocation5 + $0x3e0] sm:$0xff]
    %v184 = vld [vmem:[#allocation5 + $0x3e8] sm:$0xff]
    %v185 = vld [vmem:[#allocation5 + $0x3f0] sm:$0xff]
    %v186 = vld [vmem:[#allocation5 + $0x3f8] sm:$0xff]
    %v187 = vld [vmem:[#allocation7] sm:$0xff]
    %v189 = vlaneseq
    %v190 = vshrl.u32 %v189, 7
    %v191 = vsub.s32 0, %v190
    %v192 = vrot.slane %v187, %v191
    %v193 = vlaneseq
    %v194 = vshrl.u32 %v193, 7
    %v195 = vsub.s32 1, %v194
    %v196 = vrot.slane %v187, %v195
    %v197 = vlaneseq
    %v198 = vshrl.u32 %v197, 7
    %v199 = vsub.s32 2, %v198
    %v200 = vrot.slane %v187, %v199
    %v201 = vlaneseq
    %v202 = vshrl.u32 %v201, 7
    %v203 = vsub.s32 3, %v202
    %v204 = vrot.slane %v187, %v203
    %v205 = vlaneseq
    %v206 = vshrl.u32 %v205, 7
    %v207 = vsub.s32 4, %v206
    %v208 = vrot.slane %v187, %v207
    %v209 = vlaneseq
    %v210 = vshrl.u32 %v209, 7
    %v211 = vsub.s32 5, %v210
    %v212 = vrot.slane %v187, %v211
    %v213 = vlaneseq
    %v214 = vshrl.u32 %v213, 7
    %v215 = vsub.s32 6, %v214
    %v216 = vrot.slane %v187, %v215
    %v217 = vlaneseq
    %v218 = vshrl.u32 %v217, 7
    %v219 = vsub.s32 7, %v218
    %v220 = vrot.slane %v187, %v219
    %v231 = vunpack.c.l.s4 1966171168
    %v232 = vunpack.c.0.s8 %v231
    %v233 = vlaneseq
    %v234 = vshrl.u32 %v233, 7
    %v235 = vsub.s32 %v232, %v234
    %v236 = vrot.slane %v58, %v235
    %v237 = vcombine.high %v236, %v236
    %v239 = vunpack.c.l.s4 1966171168
    %v240 = vunpack.c.0.s8 %v239
    %v241 = vlaneseq
    %v242 = vshrl.u32 %v241, 7
    %v243 = vsub.s32 %v240, %v242
    %v244 = vrot.slane %v236, %v243
    %v246 = vunpack.c.l.s4 1966171168
    %v247 = vunpack.c.0.s8 %v246
    %v248 = vlaneseq
    %v249 = vshrl.u32 %v248, 7
    %v250 = vsub.s32 %v247, %v249
    %v251 = vrot.slane %v237, %v250
    %v382 = vunpack.c.l.b16 %v59
    %v383 = vunpack.c.h.b16 %v59
    %v384 = vunpack.c.l.b16 %v60
    %v385 = vunpack.c.h.b16 %v60
    %v386 = vunpack.c.l.b16 %v61
    %v387 = vunpack.c.h.b16 %v61
    %v388 = vunpack.c.l.b16 %v62
    %v389 = vunpack.c.h.b16 %v62
    %v390 = vunpack.c.l.b16 %v63
    %v391 = vunpack.c.h.b16 %v63
    %v392 = vunpack.c.l.b16 %v64
    %v393 = vunpack.c.h.b16 %v64
    %v394 = vunpack.c.l.b16 %v65
    %v395 = vunpack.c.h.b16 %v65
    %v396 = vunpack.c.l.b16 %v66
    %v397 = vunpack.c.h.b16 %v66
    %v398 = vunpack.c.l.b16 %v67
    %v399 = vunpack.c.h.b16 %v67
    %v400 = vunpack.c.l.b16 %v68
    %v401 = vunpack.c.h.b16 %v68
    %v402 = vunpack.c.l.b16 %v69
    %v403 = vunpack.c.h.b16 %v69
    %v404 = vunpack.c.l.b16 %v70
    %v405 = vunpack.c.h.b16 %v70
    %v406 = vunpack.c.l.b16 %v71
    %v407 = vunpack.c.h.b16 %v71
    %v408 = vunpack.c.l.b16 %v72
    %v409 = vunpack.c.h.b16 %v72
    %v410 = vunpack.c.l.b16 %v73
    %v411 = vunpack.c.h.b16 %v73
    %v412 = vunpack.c.l.b16 %v74
    %v413 = vunpack.c.h.b16 %v74
    %v414 = vunpack.c.l.b16 %v75
    %v415 = vunpack.c.h.b16 %v75
    %v416 = vunpack.c.l.b16 %v76
    %v417 = vunpack.c.h.b16 %v76
    %v418 = vunpack.c.l.b16 %v77
    %v419 = vunpack.c.h.b16 %v77
    %v420 = vunpack.c.l.b16 %v78
    %v421 = vunpack.c.h.b16 %v78
    %v422 = vunpack.c.l.b16 %v79
    %v423 = vunpack.c.h.b16 %v79
    %v424 = vunpack.c.l.b16 %v80
    %v425 = vunpack.c.h.b16 %v80
    %v426 = vunpack.c.l.b16 %v81
    %v427 = vunpack.c.h.b16 %v81
    %v428 = vunpack.c.l.b16 %v82
    %v429 = vunpack.c.h.b16 %v82
    %v430 = vunpack.c.l.b16 %v83
    %v431 = vunpack.c.h.b16 %v83
    %v432 = vunpack.c.l.b16 %v84
    %v433 = vunpack.c.h.b16 %v84
    %v434 = vunpack.c.l.b16 %v85
    %v435 = vunpack.c.h.b16 %v85
    %v436 = vunpack.c.l.b16 %v86
    %v437 = vunpack.c.h.b16 %v86
    %v438 = vunpack.c.l.b16 %v87
    %v439 = vunpack.c.h.b16 %v87
    %v440 = vunpack.c.l.b16 %v88
    %v441 = vunpack.c.h.b16 %v88
    %v442 = vunpack.c.l.b16 %v89
    %v443 = vunpack.c.h.b16 %v89
    %v444 = vunpack.c.l.b16 %v90
    %v445 = vunpack.c.h.b16 %v90
    %v446 = vunpack.c.l.b16 %v91
    %v447 = vunpack.c.h.b16 %v91
    %v448 = vunpack.c.l.b16 %v92
    %v449 = vunpack.c.h.b16 %v92
    %v450 = vunpack.c.l.b16 %v93
    %v451 = vunpack.c.h.b16 %v93
    %v452 = vunpack.c.l.b16 %v94
    %v453 = vunpack.c.h.b16 %v94
    %v454 = vunpack.c.l.b16 %v95
    %v455 = vunpack.c.h.b16 %v95
    %v456 = vunpack.c.l.b16 %v96
    %v457 = vunpack.c.h.b16 %v96
    %v458 = vunpack.c.l.b16 %v97
    %v459 = vunpack.c.h.b16 %v97
    %v460 = vunpack.c.l.b16 %v98
    %v461 = vunpack.c.h.b16 %v98
    %v462 = vunpack.c.l.b16 %v99
    %v463 = vunpack.c.h.b16 %v99
    %v464 = vunpack.c.l.b16 %v100
    %v465 = vunpack.c.h.b16 %v100
    %v466 = vunpack.c.l.b16 %v101
    %v467 = vunpack.c.h.b16 %v101
    %v468 = vunpack.c.l.b16 %v102
    %v469 = vunpack.c.h.b16 %v102
    %v470 = vunpack.c.l.b16 %v103
    %v471 = vunpack.c.h.b16 %v103
    %v472 = vunpack.c.l.b16 %v104
    %v473 = vunpack.c.h.b16 %v104
    %v474 = vunpack.c.l.b16 %v105
    %v475 = vunpack.c.h.b16 %v105
    %v476 = vunpack.c.l.b16 %v106
    %v477 = vunpack.c.h.b16 %v106
    %v478 = vunpack.c.l.b16 %v107
    %v479 = vunpack.c.h.b16 %v107
    %v480 = vunpack.c.l.b16 %v108
    %v481 = vunpack.c.h.b16 %v108
    %v482 = vunpack.c.l.b16 %v109
    %v483 = vunpack.c.h.b16 %v109
    %v484 = vunpack.c.l.b16 %v110
    %v485 = vunpack.c.h.b16 %v110
    %v486 = vunpack.c.l.b16 %v111
    %v487 = vunpack.c.h.b16 %v111
    %v488 = vunpack.c.l.b16 %v112
    %v489 = vunpack.c.h.b16 %v112
    %v490 = vunpack.c.l.b16 %v113
    %v491 = vunpack.c.h.b16 %v113
    %v492 = vunpack.c.l.b16 %v114
    %v493 = vunpack.c.h.b16 %v114
    %v494 = vunpack.c.l.b16 %v115
    %v495 = vunpack.c.h.b16 %v115
    %v496 = vunpack.c.l.b16 %v116
    %v497 = vunpack.c.h.b16 %v116
    %v498 = vunpack.c.l.b16 %v117
    %v499 = vunpack.c.h.b16 %v117
    %v500 = vunpack.c.l.b16 %v118
    %v501 = vunpack.c.h.b16 %v118
    %v502 = vunpack.c.l.b16 %v119
    %v503 = vunpack.c.h.b16 %v119
    %v504 = vunpack.c.l.b16 %v120
    %v505 = vunpack.c.h.b16 %v120
    %v506 = vunpack.c.l.b16 %v121
    %v507 = vunpack.c.h.b16 %v121
    %v508 = vunpack.c.l.b16 %v122
    %v509 = vunpack.c.h.b16 %v122
    %v510 = vunpack.c.l.b16 %v123
    %v511 = vunpack.c.h.b16 %v123
    %v512 = vunpack.c.l.b16 %v124
    %v513 = vunpack.c.h.b16 %v124
    %v514 = vunpack.c.l.b16 %v125
    %v515 = vunpack.c.h.b16 %v125
    %v516 = vunpack.c.l.b16 %v126
    %v517 = vunpack.c.h.b16 %v126
    %v518 = vunpack.c.l.b16 %v127
    %v519 = vunpack.c.h.b16 %v127
    %v520 = vunpack.c.l.b16 %v128
    %v521 = vunpack.c.h.b16 %v128
    %v522 = vunpack.c.l.b16 %v129
    %v523 = vunpack.c.h.b16 %v129
    %v524 = vunpack.c.l.b16 %v130
    %v525 = vunpack.c.h.b16 %v130
    %v526 = vunpack.c.l.b16 %v131
    %v527 = vunpack.c.h.b16 %v131
    %v528 = vunpack.c.l.b16 %v132
    %v529 = vunpack.c.h.b16 %v132
    %v530 = vunpack.c.l.b16 %v133
    %v531 = vunpack.c.h.b16 %v133
    %v532 = vunpack.c.l.b16 %v134
    %v533 = vunpack.c.h.b16 %v134
    %v534 = vunpack.c.l.b16 %v135
    %v535 = vunpack.c.h.b16 %v135
    %v536 = vunpack.c.l.b16 %v136
    %v537 = vunpack.c.h.b16 %v136
    %v538 = vunpack.c.l.b16 %v137
    %v539 = vunpack.c.h.b16 %v137
    %v540 = vunpack.c.l.b16 %v138
    %v541 = vunpack.c.h.b16 %v138
    %v542 = vunpack.c.l.b16 %v139
    %v543 = vunpack.c.h.b16 %v139
    %v544 = vunpack.c.l.b16 %v140
    %v545 = vunpack.c.h.b16 %v140
    %v546 = vunpack.c.l.b16 %v141
    %v547 = vunpack.c.h.b16 %v141
    %v548 = vunpack.c.l.b16 %v142
    %v549 = vunpack.c.h.b16 %v142
    %v550 = vunpack.c.l.b16 %v143
    %v551 = vunpack.c.h.b16 %v143
    %v552 = vunpack.c.l.b16 %v144
    %v553 = vunpack.c.h.b16 %v144
    %v554 = vunpack.c.l.b16 %v145
    %v555 = vunpack.c.h.b16 %v145
    %v556 = vunpack.c.l.b16 %v146
    %v557 = vunpack.c.h.b16 %v146
    %v558 = vunpack.c.l.b16 %v147
    %v559 = vunpack.c.h.b16 %v147
    %v560 = vunpack.c.l.b16 %v148
    %v561 = vunpack.c.h.b16 %v148
    %v562 = vunpack.c.l.b16 %v149
    %v563 = vunpack.c.h.b16 %v149
    %v564 = vunpack.c.l.b16 %v150
    %v565 = vunpack.c.h.b16 %v150
    %v566 = vunpack.c.l.b16 %v151
    %v567 = vunpack.c.h.b16 %v151
    %v568 = vunpack.c.l.b16 %v152
    %v569 = vunpack.c.h.b16 %v152
    %v570 = vunpack.c.l.b16 %v153
    %v571 = vunpack.c.h.b16 %v153
    %v572 = vunpack.c.l.b16 %v154
    %v573 = vunpack.c.h.b16 %v154
    %v574 = vunpack.c.l.b16 %v155
    %v575 = vunpack.c.h.b16 %v155
    %v576 = vunpack.c.l.b16 %v156
    %v577 = vunpack.c.h.b16 %v156
    %v578 = vunpack.c.l.b16 %v157
    %v579 = vunpack.c.h.b16 %v157
    %v580 = vunpack.c.l.b16 %v158
    %v581 = vunpack.c.h.b16 %v158
    %v582 = vunpack.c.l.b16 %v159
    %v583 = vunpack.c.h.b16 %v159
    %v584 = vunpack.c.l.b16 %v160
    %v585 = vunpack.c.h.b16 %v160
    %v586 = vunpack.c.l.b16 %v161
    %v587 = vunpack.c.h.b16 %v161
    %v588 = vunpack.c.l.b16 %v162
    %v589 = vunpack.c.h.b16 %v162
    %v590 = vunpack.c.l.b16 %v163
    %v591 = vunpack.c.h.b16 %v163
    %v592 = vunpack.c.l.b16 %v164
    %v593 = vunpack.c.h.b16 %v164
    %v594 = vunpack.c.l.b16 %v165
    %v595 = vunpack.c.h.b16 %v165
    %v596 = vunpack.c.l.b16 %v166
    %v597 = vunpack.c.h.b16 %v166
    %v598 = vunpack.c.l.b16 %v167
    %v599 = vunpack.c.h.b16 %v167
    %v600 = vunpack.c.l.b16 %v168
    %v601 = vunpack.c.h.b16 %v168
    %v602 = vunpack.c.l.b16 %v169
    %v603 = vunpack.c.h.b16 %v169
    %v604 = vunpack.c.l.b16 %v170
    %v605 = vunpack.c.h.b16 %v170
    %v606 = vunpack.c.l.b16 %v171
    %v607 = vunpack.c.h.b16 %v171
    %v608 = vunpack.c.l.b16 %v172
    %v609 = vunpack.c.h.b16 %v172
    %v610 = vunpack.c.l.b16 %v173
    %v611 = vunpack.c.h.b16 %v173
    %v612 = vunpack.c.l.b16 %v174
    %v613 = vunpack.c.h.b16 %v174
    %v614 = vunpack.c.l.b16 %v175
    %v615 = vunpack.c.h.b16 %v175
    %v616 = vunpack.c.l.b16 %v176
    %v617 = vunpack.c.h.b16 %v176
    %v618 = vunpack.c.l.b16 %v177
    %v619 = vunpack.c.h.b16 %v177
    %v620 = vunpack.c.l.b16 %v178
    %v621 = vunpack.c.h.b16 %v178
    %v622 = vunpack.c.l.b16 %v179
    %v623 = vunpack.c.h.b16 %v179
    %v624 = vunpack.c.l.b16 %v180
    %v625 = vunpack.c.h.b16 %v180
    %v626 = vunpack.c.l.b16 %v181
    %v627 = vunpack.c.h.b16 %v181
    %v628 = vunpack.c.l.b16 %v182
    %v629 = vunpack.c.h.b16 %v182
    %v630 = vunpack.c.l.b16 %v183
    %v631 = vunpack.c.h.b16 %v183
    %v632 = vunpack.c.l.b16 %v184
    %v633 = vunpack.c.h.b16 %v184
    %v634 = vunpack.c.l.b16 %v185
    %v635 = vunpack.c.h.b16 %v185
    %v636 = vunpack.c.l.b16 %v186
    %v637 = vunpack.c.h.b16 %v186
    %v638 = vpack.c.b16 %v390, %v382
    %v639 = vpack.c.b16 %v391, %v383
    %v640 = vpack.c.b16 %v392, %v384
    %v641 = vpack.c.b16 %v393, %v385
    %v642 = vpack.c.b16 %v394, %v386
    %v643 = vpack.c.b16 %v395, %v387
    %v644 = vpack.c.b16 %v396, %v388
    %v645 = vpack.c.b16 %v397, %v389
    %v646 = vpack.c.b16 %v406, %v398
    %v647 = vpack.c.b16 %v407, %v399
    %v648 = vpack.c.b16 %v408, %v400
    %v649 = vpack.c.b16 %v409, %v401
    %v650 = vpack.c.b16 %v410, %v402
    %v651 = vpack.c.b16 %v411, %v403
    %v652 = vpack.c.b16 %v412, %v404
    %v653 = vpack.c.b16 %v413, %v405
    %v654 = vpack.c.b16 %v422, %v414
    %v655 = vpack.c.b16 %v423, %v415
    %v656 = vpack.c.b16 %v424, %v416
    %v657 = vpack.c.b16 %v425, %v417
    %v658 = vpack.c.b16 %v426, %v418
    %v659 = vpack.c.b16 %v427, %v419
    %v660 = vpack.c.b16 %v428, %v420
    %v661 = vpack.c.b16 %v429, %v421
    %v662 = vpack.c.b16 %v438, %v430
    %v663 = vpack.c.b16 %v439, %v431
    %v664 = vpack.c.b16 %v440, %v432
    %v665 = vpack.c.b16 %v441, %v433
    %v666 = vpack.c.b16 %v442, %v434
    %v667 = vpack.c.b16 %v443, %v435
    %v668 = vpack.c.b16 %v444, %v436
    %v669 = vpack.c.b16 %v445, %v437
    %v670 = vpack.c.b16 %v454, %v446
    %v671 = vpack.c.b16 %v455, %v447
    %v672 = vpack.c.b16 %v456, %v448
    %v673 = vpack.c.b16 %v457, %v449
    %v674 = vpack.c.b16 %v458, %v450
    %v675 = vpack.c.b16 %v459, %v451
    %v676 = vpack.c.b16 %v460, %v452
    %v677 = vpack.c.b16 %v461, %v453
    %v678 = vpack.c.b16 %v470, %v462
    %v679 = vpack.c.b16 %v471, %v463
    %v680 = vpack.c.b16 %v472, %v464
    %v681 = vpack.c.b16 %v473, %v465
    %v682 = vpack.c.b16 %v474, %v466
    %v683 = vpack.c.b16 %v475, %v467
    %v684 = vpack.c.b16 %v476, %v468
    %v685 = vpack.c.b16 %v477, %v469
    %v686 = vpack.c.b16 %v486, %v478
    %v687 = vpack.c.b16 %v487, %v479
    %v688 = vpack.c.b16 %v488, %v480
    %v689 = vpack.c.b16 %v489, %v481
    %v690 = vpack.c.b16 %v490, %v482
    %v691 = vpack.c.b16 %v491, %v483
    %v692 = vpack.c.b16 %v492, %v484
    %v693 = vpack.c.b16 %v493, %v485
    %v694 = vpack.c.b16 %v502, %v494
    %v695 = vpack.c.b16 %v503, %v495
    %v696 = vpack.c.b16 %v504, %v496
    %v697 = vpack.c.b16 %v505, %v497
    %v698 = vpack.c.b16 %v506, %v498
    %v699 = vpack.c.b16 %v507, %v499
    %v700 = vpack.c.b16 %v508, %v500
    %v701 = vpack.c.b16 %v509, %v501
    %v702 = vpack.c.b16 %v518, %v510
    %v703 = vpack.c.b16 %v519, %v511
    %v704 = vpack.c.b16 %v520, %v512
    %v705 = vpack.c.b16 %v521, %v513
    %v706 = vpack.c.b16 %v522, %v514
    %v707 = vpack.c.b16 %v523, %v515
    %v708 = vpack.c.b16 %v524, %v516
    %v709 = vpack.c.b16 %v525, %v517
    %v710 = vpack.c.b16 %v534, %v526
    %v711 = vpack.c.b16 %v535, %v527
    %v712 = vpack.c.b16 %v536, %v528
    %v713 = vpack.c.b16 %v537, %v529
    %v714 = vpack.c.b16 %v538, %v530
    %v715 = vpack.c.b16 %v539, %v531
    %v716 = vpack.c.b16 %v540, %v532
    %v717 = vpack.c.b16 %v541, %v533
    %v718 = vpack.c.b16 %v550, %v542
    %v719 = vpack.c.b16 %v551, %v543
    %v720 = vpack.c.b16 %v552, %v544
    %v721 = vpack.c.b16 %v553, %v545
    %v722 = vpack.c.b16 %v554, %v546
    %v723 = vpack.c.b16 %v555, %v547
    %v724 = vpack.c.b16 %v556, %v548
    %v725 = vpack.c.b16 %v557, %v549
    %v726 = vpack.c.b16 %v566, %v558
    %v727 = vpack.c.b16 %v567, %v559
    %v728 = vpack.c.b16 %v568, %v560
    %v729 = vpack.c.b16 %v569, %v561
    %v730 = vpack.c.b16 %v570, %v562
    %v731 = vpack.c.b16 %v571, %v563
    %v732 = vpack.c.b16 %v572, %v564
    %v733 = vpack.c.b16 %v573, %v565
    %v734 = vpack.c.b16 %v582, %v574
    %v735 = vpack.c.b16 %v583, %v575
    %v736 = vpack.c.b16 %v584, %v576
    %v737 = vpack.c.b16 %v585, %v577
    %v738 = vpack.c.b16 %v586, %v578
    %v739 = vpack.c.b16 %v587, %v579
    %v740 = vpack.c.b16 %v588, %v580
    %v741 = vpack.c.b16 %v589, %v581
    %v742 = vpack.c.b16 %v598, %v590
    %v743 = vpack.c.b16 %v599, %v591
    %v744 = vpack.c.b16 %v600, %v592
    %v745 = vpack.c.b16 %v601, %v593
    %v746 = vpack.c.b16 %v602, %v594
    %v747 = vpack.c.b16 %v603, %v595
    %v748 = vpack.c.b16 %v604, %v596
    %v749 = vpack.c.b16 %v605, %v597
    %v750 = vpack.c.b16 %v614, %v606
    %v751 = vpack.c.b16 %v615, %v607
    %v752 = vpack.c.b16 %v616, %v608
    %v753 = vpack.c.b16 %v617, %v609
    %v754 = vpack.c.b16 %v618, %v610
    %v755 = vpack.c.b16 %v619, %v611
    %v756 = vpack.c.b16 %v620, %v612
    %v757 = vpack.c.b16 %v621, %v613
    %v758 = vpack.c.b16 %v630, %v622
    %v759 = vpack.c.b16 %v631, %v623
    %v760 = vpack.c.b16 %v632, %v624
    %v761 = vpack.c.b16 %v633, %v625
    %v762 = vpack.c.b16 %v634, %v626
    %v763 = vpack.c.b16 %v635, %v627
    %v764 = vpack.c.b16 %v636, %v628
    %v765 = vpack.c.b16 %v637, %v629
    %894 = vmatprep.subr.bf16.mxu0 %v639
    %895 = vmatpush1.bf16.msra.mxu0 %v638
    %896 = vmatprep.subr.bf16.mxu0 %v647
    %897 = vmatpush1.bf16.msra.mxu0 %v646
    %898 = vmatprep.subr.bf16.mxu0 %v655
    %899 = vmatpush1.bf16.msra.mxu0 %v654
    %900 = vmatprep.subr.bf16.mxu0 %v663
    %901 = vmatpush1.bf16.msra.mxu0 %v662
    %902 = vmatprep.subr.bf16.mxu0 %v671
    %903 = vmatpush1.bf16.msra.mxu0 %v670
    %904 = vmatprep.subr.bf16.mxu0 %v679
    %905 = vmatpush1.bf16.msra.mxu0 %v678
    %906 = vmatprep.subr.bf16.mxu0 %v687
    %907 = vmatpush1.bf16.msra.mxu0 %v686
    %908 = vmatprep.subr.bf16.mxu0 %v695
    %909 = vmatpush1.bf16.msra.mxu0 %v694
    %910 = vmatprep.subr.bf16.mxu0 %v703
    %911 = vmatpush1.bf16.msra.mxu0 %v702
    %912 = vmatprep.subr.bf16.mxu0 %v711
    %913 = vmatpush1.bf16.msra.mxu0 %v710
    %914 = vmatprep.subr.bf16.mxu0 %v719
    %915 = vmatpush1.bf16.msra.mxu0 %v718
    %916 = vmatprep.subr.bf16.mxu0 %v727
    %917 = vmatpush1.bf16.msra.mxu0 %v726
    %918 = vmatprep.subr.bf16.mxu0 %v735
    %919 = vmatpush1.bf16.msra.mxu0 %v734
    %920 = vmatprep.subr.bf16.mxu0 %v743
    %921 = vmatpush1.bf16.msra.mxu0 %v742
    %922 = vmatprep.subr.bf16.mxu0 %v751
    %923 = vmatpush1.bf16.msra.mxu0 %v750
    %924 = vmatprep.subr.bf16.mxu0 %v759
    %925 = vmatpush1.bf16.msra.mxu0 %v758
    %926 = vmatprep.mubr.bf16.mxu0 %v251
    %927 = vmatmul.mubr.bf16.gmra.mrb[0].mxu0 %v244
    %v928 = vpop.f32.mrb[0].mxu0
    %v929 = vadd.f32 %v192, %v928
    %v930 = vpop.f32.mrb[0].mxu0
    %v931 = vadd.f32 %v196, %v930
    %v932 = vpop.f32.mrb[0].mxu0
    %v933 = vpop.f32.mrb[0].mxu0
    %934 = vdwg.mxu0
    %935 = vmatprep.subr.bf16.mxu0 %v641
    %936 = vmatpush1.bf16.msra.mxu0 %v640
    %937 = vmatprep.subr.bf16.mxu0 %v649
    %938 = vmatpush1.bf16.msra.mxu0 %v648
    %939 = vmatprep.subr.bf16.mxu0 %v657
    %940 = vmatpush1.bf16.msra.mxu0 %v656
    %941 = vmatprep.subr.bf16.mxu0 %v665
    %942 = vmatpush1.bf16.msra.mxu0 %v664
    %943 = vmatprep.subr.bf16.mxu0 %v673
    %944 = vmatpush1.bf16.msra.mxu0 %v672
    %945 = vmatprep.subr.bf16.mxu0 %v681
    %946 = vmatpush1.bf16.msra.mxu0 %v680
    %947 = vmatprep.subr.bf16.mxu0 %v689
    %948 = vmatpush1.bf16.msra.mxu0 %v688
    %949 = vmatprep.subr.bf16.mxu0 %v697
    %950 = vmatpush1.bf16.msra.mxu0 %v696
    %951 = vmatprep.subr.bf16.mxu0 %v705
    %952 = vmatpush1.bf16.msra.mxu0 %v704
    %953 = vmatprep.subr.bf16.mxu0 %v713
    %954 = vmatpush1.bf16.msra.mxu0 %v712
    %955 = vmatprep.subr.bf16.mxu0 %v721
    %956 = vmatpush1.bf16.msra.mxu0 %v720
    %957 = vmatprep.subr.bf16.mxu0 %v729
    %958 = vmatpush1.bf16.msra.mxu0 %v728
    %959 = vmatprep.subr.bf16.mxu0 %v737
    %960 = vmatpush1.bf16.msra.mxu0 %v736
    %961 = vmatprep.subr.bf16.mxu0 %v745
    %962 = vmatpush1.bf16.msra.mxu0 %v744
    %963 = vmatprep.subr.bf16.mxu0 %v753
    %964 = vmatpush1.bf16.msra.mxu0 %v752
    %965 = vmatprep.subr.bf16.mxu0 %v761
    %966 = vmatpush1.bf16.msra.mxu0 %v760
    %967 = vmatprep.mubr.bf16.mxu0 %v251
    %968 = vmatmul.mubr.bf16.gmra.mrb[0].mxu0 %v244
    %v969 = vpop.f32.mrb[0].mxu0
    %v970 = vadd.f32 %v200, %v969
    %v971 = vpop.f32.mrb[0].mxu0
    %v972 = vadd.f32 %v204, %v971
    %v973 = vpop.f32.mrb[0].mxu0
    %v974 = vpop.f32.mrb[0].mxu0
    %975 = vdwg.mxu0
    %976 = vmatprep.subr.bf16.mxu0 %v643
    %977 = vmatpush1.bf16.msra.mxu0 %v642
    %978 = vmatprep.subr.bf16.mxu0 %v651
    %979 = vmatpush1.bf16.msra.mxu0 %v650
    %980 = vmatprep.subr.bf16.mxu0 %v659
    %981 = vmatpush1.bf16.msra.mxu0 %v658
    %982 = vmatprep.subr.bf16.mxu0 %v667
    %983 = vmatpush1.bf16.msra.mxu0 %v666
    %984 = vmatprep.subr.bf16.mxu0 %v675
    %985 = vmatpush1.bf16.msra.mxu0 %v674
    %986 = vmatprep.subr.bf16.mxu0 %v683
    %987 = vmatpush1.bf16.msra.mxu0 %v682
    %988 = vmatprep.subr.bf16.mxu0 %v691
    %989 = vmatpush1.bf16.msra.mxu0 %v690
    %990 = vmatprep.subr.bf16.mxu0 %v699
    %991 = vmatpush1.bf16.msra.mxu0 %v698
    %992 = vmatprep.subr.bf16.mxu0 %v707
    %993 = vmatpush1.bf16.msra.mxu0 %v706
    %994 = vmatprep.subr.bf16.mxu0 %v715
    %995 = vmatpush1.bf16.msra.mxu0 %v714
    %996 = vmatprep.subr.bf16.mxu0 %v723
    %997 = vmatpush1.bf16.msra.mxu0 %v722
    %998 = vmatprep.subr.bf16.mxu0 %v731
    %999 = vmatpush1.bf16.msra.mxu0 %v730
    %1000 = vmatprep.subr.bf16.mxu0 %v739
    %1001 = vmatpush1.bf16.msra.mxu0 %v738
    %1002 = vmatprep.subr.bf16.mxu0 %v747
    %1003 = vmatpush1.bf16.msra.mxu0 %v746
    %1004 = vmatprep.subr.bf16.mxu0 %v755
    %1005 = vmatpush1.bf16.msra.mxu0 %v754
    %1006 = vmatprep.subr.bf16.mxu0 %v763
    %1007 = vmatpush1.bf16.msra.mxu0 %v762
    %1008 = vmatprep.mubr.bf16.mxu0 %v251
    %1009 = vmatmul.mubr.bf16.gmra.mrb[0].mxu0 %v244
    %v1010 = vpop.f32.mrb[0].mxu0
    %v1011 = vadd.f32 %v208, %v1010
    %v1012 = vpop.f32.mrb[0].mxu0
    %v1013 = vadd.f32 %v212, %v1012
    %v1014 = vpop.f32.mrb[0].mxu0
    %v1015 = vpop.f32.mrb[0].mxu0
    %1016 = vdwg.mxu0
    %1017 = vmatprep.subr.bf16.mxu0 %v645
    %1018 = vmatpush1.bf16.msra.mxu0 %v644
    %1019 = vmatprep.subr.bf16.mxu0 %v653
    %1020 = vmatpush1.bf16.msra.mxu0 %v652
    %1021 = vmatprep.subr.bf16.mxu0 %v661
    %1022 = vmatpush1.bf16.msra.mxu0 %v660
    %1023 = vmatprep.subr.bf16.mxu0 %v669
    %1024 = vmatpush1.bf16.msra.mxu0 %v668
    %1025 = vmatprep.subr.bf16.mxu0 %v677
    %1026 = vmatpush1.bf16.msra.mxu0 %v676
    %1027 = vmatprep.subr.bf16.mxu0 %v685
    %1028 = vmatpush1.bf16.msra.mxu0 %v684
    %1029 = vmatprep.subr.bf16.mxu0 %v693
    %1030 = vmatpush1.bf16.msra.mxu0 %v692
    %1031 = vmatprep.subr.bf16.mxu0 %v701
    %1032 = vmatpush1.bf16.msra.mxu0 %v700
    %1033 = vmatprep.subr.bf16.mxu0 %v709
    %1034 = vmatpush1.bf16.msra.mxu0 %v708
    %1035 = vmatprep.subr.bf16.mxu0 %v717
    %1036 = vmatpush1.bf16.msra.mxu0 %v716
    %1037 = vmatprep.subr.bf16.mxu0 %v725
    %1038 = vmatpush1.bf16.msra.mxu0 %v724
    %1039 = vmatprep.subr.bf16.mxu0 %v733
    %1040 = vmatpush1.bf16.msra.mxu0 %v732
    %1041 = vmatprep.subr.bf16.mxu0 %v741
    %1042 = vmatpush1.bf16.msra.mxu0 %v740
    %1043 = vmatprep.subr.bf16.mxu0 %v749
    %1044 = vmatpush1.bf16.msra.mxu0 %v748
    %1045 = vmatprep.subr.bf16.mxu0 %v757
    %1046 = vmatpush1.bf16.msra.mxu0 %v756
    %1047 = vmatprep.subr.bf16.mxu0 %v765
    %1048 = vmatpush1.bf16.msra.mxu0 %v764
    %1049 = vmatprep.mubr.bf16.mxu0 %v251
    %1050 = vmatmul.mubr.bf16.gmra.mrb[0].mxu0 %v244
    %v1051 = vpop.f32.mrb[0].mxu0
    %v1052 = vadd.f32 %v216, %v1051
    %v1053 = vpop.f32.mrb[0].mxu0
    %v1054 = vadd.f32 %v220, %v1053
    %v1055 = vpop.f32.mrb[0].mxu0
    %v1056 = vpop.f32.mrb[0].mxu0
    %1057 = vdwg.mxu0
    %v1058 = vld [vmem:[%s3] sm:$0x3]
    %v1059 = vld [vmem:[%s4] sm:$0x3]
    %vm1060 = vcmask 1041408
    %v1061 = vsel %vm1060, %v929, 0.0
    %v1062 = vsel %vm1060, %v931, 0.0
    %v1063 = vadd.f32 %v1061, %v1062
    %1064 = vadd.xlane.f32.xlu0 %v1063
    %v1065 = vpop.xlane.xlu0 %1064
    %v1066 = vrcp.pop 256.0
    %v1067 = vmul.f32 %v1065, %v1066
    %v1068 = vsub.f32 %v929, %v1067
    %v1069 = vsub.f32 %v931, %v1067
    %v1070 = vmul.f32 %v1068, %v1068
    %v1071 = vmul.f32 %v1069, %v1069
    %v1072 = vsel %vm1060, %v1070, 0.0
    %v1073 = vsel %vm1060, %v1071, 0.0
    %v1074 = vadd.f32 %v1072, %v1073
    %1075 = vadd.xlane.f32.xlu0 %v1074
    %v1076 = vpop.xlane.xlu0 %1075
    %v1077 = vmul.f32 %v1076, %v1066
    %v1078 = vadd.f32 %v1077, 1e-05
    %v1079 = vrsqrt.pop %v1078
    %v1080 = vmul.f32 %v1068, %v1079
    %v1081 = vmul.f32 %v1069, %v1079
    %v1083 = vlaneseq
    %v1084 = vshrl.u32 %v1083, 7
    %v1085 = vsub.s32 0, %v1084
    %v1086 = vrot.slane %v1058, %v1085
    %v1087 = vlaneseq
    %v1088 = vshrl.u32 %v1087, 7
    %v1089 = vsub.s32 1, %v1088
    %v1090 = vrot.slane %v1058, %v1089
    %v1093 = vmul.f32 %v1080, %v1086
    %v1094 = vmul.f32 %v1081, %v1090
    %v1096 = vlaneseq
    %v1097 = vshrl.u32 %v1096, 7
    %v1098 = vsub.s32 0, %v1097
    %v1099 = vrot.slane %v1059, %v1098
    %v1100 = vlaneseq
    %v1101 = vshrl.u32 %v1100, 7
    %v1102 = vsub.s32 1, %v1101
    %v1103 = vrot.slane %v1059, %v1102
    %v1106 = vadd.f32 %v1093, %v1099
    %v1107 = vadd.f32 %v1094, %v1103
    %v1110 = vcombine.low %v1106, %v1107
    %v1112 = vunpack.c.l.s4 1983009808
    %v1113 = vunpack.c.0.s8 %v1112
    %v1114 = vlaneseq
    %v1115 = vshrl.u32 %v1114, 7
    %v1116 = vsub.s32 %v1113, %v1115
    %v1117 = vrot.slane %v1110, %v1116
    %1119 = vst [vmem:[#allocation8] sm:$0xf] %v1117
    %v1120 = vsel %vm1060, %v970, 0.0
    %v1121 = vsel %vm1060, %v972, 0.0
    %v1122 = vadd.f32 %v1120, %v1121
    %1123 = vadd.xlane.f32.xlu0 %v1122
    %v1124 = vpop.xlane.xlu0 %1123
    %v1125 = vmul.f32 %v1124, %v1066
    %v1126 = vsub.f32 %v970, %v1125
    %v1127 = vsub.f32 %v972, %v1125
    %v1128 = vmul.f32 %v1126, %v1126
    %v1129 = vmul.f32 %v1127, %v1127
    %v1130 = vsel %vm1060, %v1128, 0.0
    %v1131 = vsel %vm1060, %v1129, 0.0
    %v1132 = vadd.f32 %v1130, %v1131
    %1133 = vadd.xlane.f32.xlu0 %v1132
    %v1134 = vpop.xlane.xlu0 %1133
    %v1135 = vmul.f32 %v1134, %v1066
    %v1136 = vadd.f32 %v1135, 1e-05
    %v1137 = vrsqrt.pop %v1136
    %v1138 = vmul.f32 %v1126, %v1137
    %v1139 = vmul.f32 %v1127, %v1137
    %v1140 = vmul.f32 %v1138, %v1086
    %v1141 = vmul.f32 %v1139, %v1090
    %v1142 = vadd.f32 %v1140, %v1099
    %v1143 = vadd.f32 %v1141, %v1103
    %v1146 = vcombine.low %v1142, %v1143
    %v1148 = vunpack.c.l.s4 1983009808
    %v1149 = vunpack.c.0.s8 %v1148
    %v1150 = vlaneseq
    %v1151 = vshrl.u32 %v1150, 7
    %v1152 = vsub.s32 %v1149, %v1151
    %v1153 = vrot.slane %v1146, %v1152
    %1155 = vst [vmem:[#allocation8 + $0x4] sm:$0xf] %v1153
    %v1156 = vsel %vm1060, %v1011, 0.0
    %v1157 = vsel %vm1060, %v1013, 0.0
    %v1158 = vadd.f32 %v1156, %v1157
    %1159 = vadd.xlane.f32.xlu0 %v1158
    %v1160 = vpop.xlane.xlu0 %1159
    %v1161 = vmul.f32 %v1160, %v1066
    %v1162 = vsub.f32 %v1011, %v1161
    %v1163 = vsub.f32 %v1013, %v1161
    %v1164 = vmul.f32 %v1162, %v1162
    %v1165 = vmul.f32 %v1163, %v1163
    %v1166 = vsel %vm1060, %v1164, 0.0
    %v1167 = vsel %vm1060, %v1165, 0.0
    %v1168 = vadd.f32 %v1166, %v1167
    %1169 = vadd.xlane.f32.xlu0 %v1168
    %v1170 = vpop.xlane.xlu0 %1169
    %v1171 = vmul.f32 %v1170, %v1066
    %v1172 = vadd.f32 %v1171, 1e-05
    %v1173 = vrsqrt.pop %v1172
    %v1174 = vmul.f32 %v1162, %v1173
    %v1175 = vmul.f32 %v1163, %v1173
    %v1176 = vmul.f32 %v1174, %v1086
    %v1177 = vmul.f32 %v1175, %v1090
    %v1178 = vadd.f32 %v1176, %v1099
    %v1179 = vadd.f32 %v1177, %v1103
    %v1182 = vcombine.low %v1178, %v1179
    %v1184 = vunpack.c.l.s4 1983009808
    %v1185 = vunpack.c.0.s8 %v1184
    %v1186 = vlaneseq
    %v1187 = vshrl.u32 %v1186, 7
    %v1188 = vsub.s32 %v1185, %v1187
    %v1189 = vrot.slane %v1182, %v1188
    %1191 = vst [vmem:[#allocation8 + $0x8] sm:$0xf] %v1189
    %v1192 = vsel %vm1060, %v1052, 0.0
    %v1193 = vsel %vm1060, %v1054, 0.0
    %v1194 = vadd.f32 %v1192, %v1193
    %1195 = vadd.xlane.f32.xlu0 %v1194
    %v1196 = vpop.xlane.xlu0 %1195
    %v1197 = vmul.f32 %v1196, %v1066
    %v1198 = vsub.f32 %v1052, %v1197
    %v1199 = vsub.f32 %v1054, %v1197
    %v1200 = vmul.f32 %v1198, %v1198
    %v1201 = vmul.f32 %v1199, %v1199
    %v1202 = vsel %vm1060, %v1200, 0.0
    %v1203 = vsel %vm1060, %v1201, 0.0
    %v1204 = vadd.f32 %v1202, %v1203
    %1205 = vadd.xlane.f32.xlu0 %v1204
    %v1206 = vpop.xlane.xlu0 %1205
    %v1207 = vmul.f32 %v1206, %v1066
    %v1208 = vadd.f32 %v1207, 1e-05
    %v1209 = vrsqrt.pop %v1208
    %v1210 = vmul.f32 %v1198, %v1209
    %v1211 = vmul.f32 %v1199, %v1209
    %v1212 = vmul.f32 %v1210, %v1086
    %v1213 = vmul.f32 %v1211, %v1090
    %v1214 = vadd.f32 %v1212, %v1099
    %v1215 = vadd.f32 %v1213, %v1103
    %v1218 = vcombine.low %v1214, %v1215
    %v1220 = vunpack.c.l.s4 1983009808
    %v1221 = vunpack.c.0.s8 %v1220
    %v1222 = vlaneseq
    %v1223 = vshrl.u32 %v1222, 7
    %v1224 = vsub.s32 %v1221, %v1223
    %v1225 = vrot.slane %v1218, %v1224
    %1227 = vst [vmem:[#allocation8 + $0xc] sm:$0xf] %v1225
    // Predicated region
    $region34: #{tpu_custom_call.1} parent=1 // pred_check
      _
    $region35: #{tpu_custom_call.1} parent=1 // pred_check_branch
      %1229 = sbr.rel (0) target = $region37
    $region36: #{tpu_custom_call.1} parent=1 // pred_region
      %s1231 = ssub.s32 256, 256
      %1232 = vsyncadd [#allocation4], %s1231
      %s1234 = sshll.u32 [#allocation8], 4
      %s1235 = int_to_ptr.vmem [resolvable:$true] %s1234
      %1237 = dma.vmem_to_hbm [thread:$0]  %s1235, 256, %s5, [#allocation4]
    $region37: #{tpu_custom_call.1} parent=1 // pred_fallthru
      _
    // Predicated region
    $region38: #{tpu_custom_call.1} parent=1 // pred_check
      _
    $region39: #{tpu_custom_call.1} parent=1 // pred_check_branch
      %1239 = sbr.rel (0) target = $region41
    $region40: #{tpu_custom_call.1} parent=1 // pred_region
      %1240 = dma.done [#allocation4], 256
    $region41: #{tpu_custom_call.1} parent=1 // pred_fallthru
      _
    %1241 = vsyncpa [#allocation3], 1
    %1242 = vsyncpa [#allocation6], 1
    %1243 = vsyncpa [#allocation4], 1

</llo_original>
